<compile_context>
chip_gen: v5e
topology: v5e:2x2
jax: 0.10.0
libtpu: 0.0.40
codegen_flags: <defaults>
</compile_context>

<pallas_src>
import functools

import jax
import jax.numpy as jnp
import numpy as np
from jax.experimental import pallas as pl
from jax.experimental.pallas import tpu as pltpu


def _round_up(x, m):
    return (x + m - 1) // m * m


def _prologue_kernel(x_ref, w_ref, a1t_ref, a2_ref, h_ref, e1_ref, e2_ref):
    """h = X @ W;  e1_row[0,j] = h[j].a1;  e2[i,0] = h[i].a2  (computed once)."""
    h = jnp.dot(x_ref[...], w_ref[...], preferred_element_type=jnp.float32)
    # neighbor term as a lane-dense row: (1, F) x (N, F)^T -> (1, N)
    e1_ref[...] = jax.lax.dot_general(
        a1t_ref[...], h,
        dimension_numbers=(((1,), (1,)), ((), ())),
        preferred_element_type=jnp.float32)
    # center term as a column: (N, F) x (F, 1) -> (N, 1)
    e2_ref[...] = jnp.dot(h, a2_ref[...], preferred_element_type=jnp.float32)
    h_ref[...] = h.astype(h_ref.dtype)


def _attention_kernel(adj_ref, e1_ref, e2_ref, h_ref, out_ref, *, alpha):
    """One query-row block: masked softmax over neighbors + bf16 aggregation + ELU."""
    # e[i, j] = e2[i] + e1[j]   (pure VPU broadcast add)
    e = e2_ref[...] + e1_ref[...]                                  # (TILE_I, N_pad)
    e = jnp.where(e > 0, e, alpha * e)                             # LeakyReLU(alpha)

    # Single additive mask: non-neighbors get -1e30 and underflow to 0 in exp().
    logits = jnp.where(adj_ref[...] != 0, e, jnp.float32(-1e30))
    m = jnp.max(logits, axis=-1, keepdims=True)                    # (TILE_I, 1)
    p = jnp.exp(logits - m)                                        # masked -> 0
    l = jnp.sum(p, axis=-1, keepdims=True)                         # >= 1 always
    inv_l = pl.reciprocal(l, approx=True)                          # EUP slot

    # Aggregate on the MXU in bf16 with f32 accumulation; normalize afterwards
    # (diag(1/l) @ (p @ h) == (p/l) @ h), scaling only (TILE_I, F) values.
    hp = jnp.dot(p.astype(jnp.bfloat16), h_ref[...],
                 preferred_element_type=jnp.float32) * inv_l       # (TILE_I, F_pad)

    # Rows with zero neighbors (incl. padded rows) -> zero output, matching the
    # sparse spmm in the original module.
    hp = jnp.where(m > jnp.float32(-1e29), hp, 0.0)

    # ELU (concat=True path)
    out_ref[...] = jnp.where(hp > 0, hp, jnp.exp(hp) - 1.0)


def gat_forward(x, W, a, adj, alpha=0.2, *, tile_i=128):
    """x:(N,in_f)  W:(in_f,out_f)  a:(2*out_f,1)  adj:(N,N) -> (N,out_f) f32."""
    N, in_f = x.shape
    out_f = W.shape[1]

    # int8 adjacency blocks need the second-minor dim to be a multiple of 32.
    tile_i = max(32, _round_up(min(tile_i, _round_up(N, 32)), 32))
    n_pad = _round_up(N, tile_i)
    f_pad = _round_up(max(out_f, 1), 128)      # lane-dense output stores

    f32 = jnp.float32
    x_p = jnp.pad(x.astype(f32), ((0, n_pad - N), (0, 0)))
    w_p = jnp.pad(W.astype(f32), ((0, 0), (0, f_pad - out_f)))
    a1t = jnp.pad(a[:out_f, :].astype(f32).T, ((0, 0), (0, f_pad - out_f)))  # (1, F_pad)
    a2p = jnp.pad(a[out_f:, :].astype(f32), ((0, f_pad - out_f), (0, 0)))    # (F_pad, 1)
    adj_p = jnp.pad((adj != 0).astype(jnp.int8),
                    ((0, n_pad - N), (0, n_pad - N)))                        # int8: 4x less HBM

    vmem = pltpu.MemorySpace.VMEM

    # ---- prologue: h (bf16), e1_row (1,N), e2 (N,1) -- computed exactly once ----
    h_bf, e1_row, e2_col = pl.pallas_call(
        _prologue_kernel,
        out_shape=(jax.ShapeDtypeStruct((n_pad, f_pad), jnp.bfloat16),
                   jax.ShapeDtypeStruct((1, n_pad), f32),
                   jax.ShapeDtypeStruct((n_pad, 1), f32)),
        in_specs=[pl.BlockSpec(memory_space=vmem)] * 4,
        out_specs=(pl.BlockSpec(memory_space=vmem),) * 3,
    )(x_p, w_p, a1t, a2p)

    # ---- main: tiled masked-softmax attention + aggregation ----
    grid = (n_pad // tile_i,)
    kernel = functools.partial(_attention_kernel, alpha=float(alpha))
    cost = pl.CostEstimate(
        flops=int(2 * n_pad * n_pad * f_pad + 8 * n_pad * n_pad),
        transcendentals=int(n_pad * n_pad + n_pad * f_pad),
        bytes_accessed=int(n_pad * n_pad            # int8 adj
                           + 2 * n_pad * f_pad      # bf16 h
                           + 4 * n_pad * f_pad),    # f32 out
    )
    out_p = pl.pallas_call(
        kernel,
        out_shape=jax.ShapeDtypeStruct((n_pad, f_pad), f32),
        grid=grid,
        in_specs=[
            pl.BlockSpec((tile_i, n_pad), lambda i: (i, 0)),   # adj row block (streamed)
            pl.BlockSpec((1, n_pad), lambda i: (0, 0)),        # e1 row   (VMEM resident)
            pl.BlockSpec((tile_i, 1), lambda i: (i, 0)),       # e2 block
            pl.BlockSpec((n_pad, f_pad), lambda i: (0, 0)),    # h (bf16, VMEM resident)
        ],
        out_specs=pl.BlockSpec((tile_i, f_pad), lambda i: (i, 0)),
        compiler_params=pltpu.CompilerParams(
            dimension_semantics=("parallel",)),                # megacore sharding
        cost_estimate=cost,
    )(adj_p, e1_row, e2_col, h_bf)

    return out_p[:N, :out_f]


def _reference(x, W, a, adj, alpha):
    """Pure-JAX f32 reference of the same dense math (for validation)."""
    out_f = W.shape[1]
    h = x @ W
    e = (h @ a[out_f:, :]) + (h @ a[:out_f, :]).T
    e = jnp.where(e > 0, e, alpha * e)
    mask = adj != 0
    logits = jnp.where(mask, e, -1e30)
    p = jnp.exp(logits - logits.max(-1, keepdims=True))
    p = jnp.where(mask, p, 0.0)
    att = p / p.sum(-1, keepdims=True)
    hp = att @ h
    return jnp.where(hp > 0, hp, jnp.exp(hp) - 1.0)


if __name__ == "__main__":
    key = jax.random.PRNGKey(0)
    N, in_features, out_features = 70, 16, 32
    alpha = 0.2          # LeakyReLU negative slope (module arg)
    # dropout = 0.5 is stored by the module but never used in forward.

    k1, k2, k3, k4 = jax.random.split(key, 4)

    # Deterministic parameter init mimicking nn.init.xavier_uniform_(gain=1.414)
    gain = 1.414
    bw = gain * np.sqrt(6.0 / (in_features + out_features))
    W = jax.random.uniform(k1, (in_features, out_features), jnp.float32, -bw, bw)
    ba = gain * np.sqrt(6.0 / (2 * out_features + 1))
    a = jax.random.uniform(k2, (2 * out_features, 1), jnp.float32, -ba, ba)

    # Inputs: node features + binary adjacency (self loops guarantee >=1 neighbor/row)
    x = jax.random.normal(k3, (N, in_features), jnp.float32)
    adj = (jax.random.uniform(k4, (N, N)) < 0.3).astype(jnp.float32)
    adj = jnp.maximum(adj, jnp.eye(N, dtype=jnp.float32))

    # tile_i=32 -> 3-step parallel grid over padded N=96 rows (exercises tiling).
    out = gat_forward(x, W, a, adj, alpha, tile_i=32)
    out = jax.block_until_ready(out)

    ref = _reference(x, W, a, adj, alpha)
    assert out.shape == (N, out_features)
    assert np.all(np.isfinite(np.asarray(out)))
    assert np.allclose(np.asarray(out), np.asarray(ref), rtol=2e-2, atol=2e-2)
    print("KERNEL_OK")
</pallas_src>

<mosaic_0001>
module attributes {stable_mosaic.version = 11 : i64} {
  func.func @_prologue_kernel(%arg0: memref<96x16xf32, #tpu.memory_space<vmem>>, %arg1: memref<16x128xf32, #tpu.memory_space<vmem>>, %arg2: memref<1x128xf32, #tpu.memory_space<vmem>>, %arg3: memref<128x1xf32, #tpu.memory_space<vmem>>, %arg4: memref<96x128xbf16, #tpu.memory_space<vmem>>, %arg5: memref<1x96xf32, #tpu.memory_space<vmem>>, %arg6: memref<96x1xf32, #tpu.memory_space<vmem>>) attributes {dimension_semantics = [], scalar_prefetch = 0 : i64, scratch_operands = 0 : i64, tpu.core_type = #tpu.core_type<tc>} {
    %c0 = arith.constant 0 : index
    %c0_0 = arith.constant 0 : index
    %0 = vector.load %arg0[%c0, %c0_0] : memref<96x16xf32, #tpu.memory_space<vmem>>, vector<96x16xf32>
    %c0_1 = arith.constant 0 : index
    %c0_2 = arith.constant 0 : index
    %1 = vector.load %arg1[%c0_1, %c0_2] : memref<16x128xf32, #tpu.memory_space<vmem>>, vector<16x128xf32>
    %cst = arith.constant dense<0.000000e+00> : vector<96x128xf32>
    %2 = tpu.matmul %0, %1, %cst {dimension_numbers = #tpu.dot_dimension_numbers<[1], [0], [0], [1], [0, 0, 1, 1], [], []>} : vector<96x16xf32>, vector<16x128xf32>, vector<96x128xf32> -> vector<96x128xf32>
    %c0_3 = arith.constant 0 : index
    %c0_4 = arith.constant 0 : index
    %3 = vector.load %arg2[%c0_3, %c0_4] : memref<1x128xf32, #tpu.memory_space<vmem>>, vector<1x128xf32>
    %cst_5 = arith.constant dense<0.000000e+00> : vector<1x96xf32>
    %4 = tpu.matmul %3, %2, %cst_5 {dimension_numbers = #tpu.dot_dimension_numbers<[1], [1], [0], [0], [0, 0, 1, 0], [], []>} : vector<1x128xf32>, vector<96x128xf32>, vector<1x96xf32> -> vector<1x96xf32>
    %c0_6 = arith.constant 0 : index
    %c0_7 = arith.constant 0 : index
    %5 = vector.load %arg5[%c0_6, %c0_7] : memref<1x96xf32, #tpu.memory_space<vmem>>, vector<1x96xf32>
    tpu.vector_store %arg5[%c0_6, %c0_7], %4 {strides = array<i32>} : memref<1x96xf32, #tpu.memory_space<vmem>>, vector<1x96xf32>,
    %c0_8 = arith.constant 0 : index
    %c0_9 = arith.constant 0 : index
    %6 = vector.load %arg3[%c0_8, %c0_9] : memref<128x1xf32, #tpu.memory_space<vmem>>, vector<128x1xf32>
    %cst_10 = arith.constant dense<0.000000e+00> : vector<96x1xf32>
    %7 = tpu.matmul %2, %6, %cst_10 {dimension_numbers = #tpu.dot_dimension_numbers<[1], [0], [0], [1], [0, 0, 1, 1], [], []>} : vector<96x128xf32>, vector<128x1xf32>, vector<96x1xf32> -> vector<96x1xf32>
    %c0_11 = arith.constant 0 : index
    %c0_12 = arith.constant 0 : index
    %8 = vector.load %arg6[%c0_11, %c0_12] : memref<96x1xf32, #tpu.memory_space<vmem>>, vector<96x1xf32>
    tpu.vector_store %arg6[%c0_11, %c0_12], %7 {strides = array<i32>} : memref<96x1xf32, #tpu.memory_space<vmem>>, vector<96x1xf32>,
    %9 = arith.truncf %2 : vector<96x128xf32> to vector<96x128xbf16>
    %c0_13 = arith.constant 0 : index
    %c0_14 = arith.constant 0 : index
    %10 = vector.load %arg4[%c0_13, %c0_14] : memref<96x128xbf16, #tpu.memory_space<vmem>>, vector<96x128xbf16>
    tpu.vector_store %arg4[%c0_13, %c0_14], %9 {strides = array<i32>} : memref<96x128xbf16, #tpu.memory_space<vmem>>, vector<96x128xbf16>,
    return
  }
}

</mosaic_0001>

<llo_original>
// kernel: tpu_custom_call.1
$region0: #{tpu_custom_call.1}
  #allocation0 [shape = 'u32[]', space=smem, size = 0x4, offset = 0x4, fixed_abs, tag = 'smem constant byte address 0x4 - core index']
  #allocation1 [shape = 'u32[72,128]{1,0:T(1,128)}', space=vmem, size = 0x9000, scoped, tag = 'internal scratch']
  %s0 = inlined_call_operand.vmem [shape: f32[96,16], index: 0, kind: input, shape index: {}]
  %s1 = inlined_call_operand.vmem [shape: f32[16,128], index: 1, kind: input, shape index: {}]
  %s2 = inlined_call_operand.vmem [shape: f32[1,128], index: 2, kind: input, shape index: {}]
  %s3 = inlined_call_operand.vmem [shape: f32[128,1], index: 3, kind: input, shape index: {}]
  %s4 = inlined_call_operand.hbm [shape: bf16[96,128], index: 4, kind: output, shape index: {0}]
  %s5 = inlined_call_operand.hbm [shape: f32[1,96], index: 5, kind: output, shape index: {1}]
  %s6 = inlined_call_operand.vmem [shape: f32[96,1], index: 6, kind: output, shape index: {2}]
  %7 = xla_tuple %s4, %s5, %s6
  %s8 = sld [smem:[#allocation0]]
  $region42: #{tpu_custom_call.1} parent=0
    _
  %s10 = ssub.s32 1, %s8
  %s11 = scalar_select 0, %s10, %s8
  $region1: #{tpu_custom_call.1} parent=0
    #allocation2 [shape = 'u8[24576]{0}', space=vmem, size = 0x6000, scoped, tag = 'output window, operand 0, single buffered']
    #allocation3 [shape = 's32[1]{0}', space=sflag, size = 0x4, scoped, tag = 'scoped memory for tpu_custom_call.1']
    #allocation4 [shape = 'u8[512]{0}', space=vmem, size = 0x400, scoped, tag = 'output window, operand 1, single buffered']
    #allocation5 [shape = 's32[1]{0}', space=sflag, size = 0x4, scoped, tag = 'scoped memory for tpu_custom_call.1']
    %12 = vsyncpa [#allocation3], 0
    %13 = vsyncpa [#allocation5], 0
    // Predicated region
    $region2: #{tpu_custom_call.1} parent=1 // pred_check
      _
    $region3: #{tpu_custom_call.1} parent=1 // pred_check_branch
      %15 = sbr.rel (0) target = $region5
    $region4: #{tpu_custom_call.1} parent=1 // pred_region
      _
    $region5: #{tpu_custom_call.1} parent=1 // pred_fallthru
      _
    // Predicated region
    $region6: #{tpu_custom_call.1} parent=1 // pred_check
      _
    $region7: #{tpu_custom_call.1} parent=1 // pred_check_branch
      %17 = sbr.rel (0) target = $region9
    $region8: #{tpu_custom_call.1} parent=1 // pred_region
      _
    $region9: #{tpu_custom_call.1} parent=1 // pred_fallthru
      _
    // Predicated region
    $region10: #{tpu_custom_call.1} parent=1 // pred_check
      _
    $region11: #{tpu_custom_call.1} parent=1 // pred_check_branch
      %19 = sbr.rel (0) target = $region13
    $region12: #{tpu_custom_call.1} parent=1 // pred_region
      _
    $region13: #{tpu_custom_call.1} parent=1 // pred_fallthru
      _
    // Predicated region
    $region14: #{tpu_custom_call.1} parent=1 // pred_check
      _
    $region15: #{tpu_custom_call.1} parent=1 // pred_check_branch
      %21 = sbr.rel (0) target = $region17
    $region16: #{tpu_custom_call.1} parent=1 // pred_region
      _
    $region17: #{tpu_custom_call.1} parent=1 // pred_fallthru
      _
    %v22 = vld [vmem:[%s0] sm:$0xff]
    %v23 = vld [vmem:[%s0 + $0x8] sm:$0xff]
    %v24 = vld [vmem:[%s0 + $0x10] sm:$0xff]
    %v25 = vld [vmem:[%s0 + $0x18] sm:$0xff]
    %v26 = vld [vmem:[%s0 + $0x20] sm:$0xff]
    %v27 = vld [vmem:[%s0 + $0x28] sm:$0xff]
    %v28 = vld [vmem:[%s0 + $0x30] sm:$0xff]
    %v29 = vld [vmem:[%s0 + $0x38] sm:$0xff]
    %v30 = vld [vmem:[%s0 + $0x40] sm:$0xff]
    %v31 = vld [vmem:[%s0 + $0x48] sm:$0xff]
    %v32 = vld [vmem:[%s0 + $0x50] sm:$0xff]
    %v33 = vld [vmem:[%s0 + $0x58] sm:$0xff]
    %v34 = vld [vmem:[%s1] sm:$0xff]
    %v35 = vld [vmem:[%s1 + $0x8] sm:$0xff]
    %vm36 = vcmask 130048
    %v38 = vsel %vm36, %v22, 0
    %v41 = vsel %vm36, %v23, 0
    %v44 = vsel %vm36, %v24, 0
    %v47 = vsel %vm36, %v25, 0
    %v50 = vsel %vm36, %v26, 0
    %v53 = vsel %vm36, %v27, 0
    %v56 = vsel %vm36, %v28, 0
    %v59 = vsel %vm36, %v29, 0
    %v62 = vsel %vm36, %v30, 0
    %v65 = vsel %vm36, %v31, 0
    %v68 = vsel %vm36, %v32, 0
    %v71 = vsel %vm36, %v33, 0
    %73 = vmatpush.msra.mxu0 0.0
    %74 = vmatpush.msra.mxu0 0.0
    %75 = vmatpush.msra.mxu0 0.0
    %76 = vmatpush.msra.mxu0 0.0
    %77 = vmatpush.msra.mxu0 0.0
    %78 = vmatpush.msra.mxu0 0.0
    %79 = vmatpush.msra.mxu0 0.0
    %80 = vmatpush.msra.mxu0 0.0
    %81 = vmatpush.msra.mxu0 0.0
    %82 = vmatpush.msra.mxu0 0.0
    %83 = vmatpush.msra.mxu0 0.0
    %84 = vmatpush.msra.mxu0 0.0
    %85 = vmatpush.msra.mxu0 0.0
    %86 = vmatpush.msra.mxu0 0.0
    %87 = vmatpush.msra.mxu0 %v35
    %88 = vmatpush.msra.mxu0 %v34
    %89 = vmatmul.f32.gmra.mxu0 %v38
    %v90 = vpop.f32.mrf.mxu0
    %v91 = vadd.f32 0.0, %v90
    %92 = vmatmul.f32.gmra.mxu0 %v41
    %v93 = vpop.f32.mrf.mxu0
    %v94 = vadd.f32 0.0, %v93
    %95 = vmatmul.f32.gmra.mxu0 %v44
    %v96 = vpop.f32.mrf.mxu0
    %v97 = vadd.f32 0.0, %v96
    %98 = vmatmul.f32.gmra.mxu0 %v47
    %v99 = vpop.f32.mrf.mxu0
    %v100 = vadd.f32 0.0, %v99
    %101 = vmatmul.f32.gmra.mxu0 %v50
    %v102 = vpop.f32.mrf.mxu0
    %v103 = vadd.f32 0.0, %v102
    %104 = vmatmul.f32.gmra.mxu0 %v53
    %v105 = vpop.f32.mrf.mxu0
    %v106 = vadd.f32 0.0, %v105
    %107 = vmatmul.f32.gmra.mxu0 %v56
    %v108 = vpop.f32.mrf.mxu0
    %v109 = vadd.f32 0.0, %v108
    %110 = vmatmul.f32.gmra.mxu0 %v59
    %v111 = vpop.f32.mrf.mxu0
    %v112 = vadd.f32 0.0, %v111
    %113 = vmatmul.f32.gmra.mxu0 %v62
    %v114 = vpop.f32.mrf.mxu0
    %v115 = vadd.f32 0.0, %v114
    %116 = vmatmul.f32.gmra.mxu0 %v65
    %v117 = vpop.f32.mrf.mxu0
    %v118 = vadd.f32 0.0, %v117
    %119 = vmatmul.f32.gmra.mxu0 %v68
    %v120 = vpop.f32.mrf.mxu0
    %v121 = vadd.f32 0.0, %v120
    %122 = vmatmul.f32.gmra.mxu0 %v71
    %v123 = vpop.f32.mrf.mxu0
    %v124 = vadd.f32 0.0, %v123
    %125 = vdwg.mxu0
    %v126 = vld [vmem:[%s2] sm:$0x1]
    %127 = vmatpush.xpose.msra.mxu0 0.0
    %128 = vmatpush.xpose.msra.mxu0 0.0
    %129 = vmatpush.xpose.msra.mxu0 0.0
    %130 = vmatpush.xpose.msra.mxu0 0.0
    %131 = vmatpush.xpose.msra.mxu0 %v124
    %132 = vmatpush.xpose.msra.mxu0 %v121
    %133 = vmatpush.xpose.msra.mxu0 %v118
    %134 = vmatpush.xpose.msra.mxu0 %v115
    %135 = vmatpush.xpose.msra.mxu0 %v112
    %136 = vmatpush.xpose.msra.mxu0 %v109
    %137 = vmatpush.xpose.msra.mxu0 %v106
    %138 = vmatpush.xpose.msra.mxu0 %v103
    %139 = vmatpush.xpose.msra.mxu0 %v100
    %140 = vmatpush.xpose.msra.mxu0 %v97
    %141 = vmatpush.xpose.msra.mxu0 %v94
    %142 = vmatpush.xpose.msra.mxu0 %v91
    %143 = vmatmul.f32.gmra.mxu0 %v126
    %v144 = vpop.f32.mrf.mxu0
    %v145 = vadd.f32 0.0, %v144
    %146 = vdwg.mxu0
    %vm147 = vcmask 778240
    %148 = vst.msk [vmem:[#allocation4] sm:$0x1] %vm147, %v145
    %v149 = vld [vmem:[%s3] sm:$0xff]
    %v150 = vld [vmem:[%s3 + $0x8] sm:$0xff]
    %v151 = vld [vmem:[%s3 + $0x10] sm:$0xff]
    %v152 = vld [vmem:[%s3 + $0x18] sm:$0xff]
    %v153 = vld [vmem:[%s3 + $0x20] sm:$0xff]
    %v154 = vld [vmem:[%s3 + $0x28] sm:$0xff]
    %v155 = vld [vmem:[%s3 + $0x30] sm:$0xff]
    %v156 = vld [vmem:[%s3 + $0x38] sm:$0xff]
    %v157 = vld [vmem:[%s3 + $0x40] sm:$0xff]
    %v158 = vld [vmem:[%s3 + $0x48] sm:$0xff]
    %v159 = vld [vmem:[%s3 + $0x50] sm:$0xff]
    %v160 = vld [vmem:[%s3 + $0x58] sm:$0xff]
    %v161 = vld [vmem:[%s3 + $0x60] sm:$0xff]
    %v162 = vld [vmem:[%s3 + $0x68] sm:$0xff]
    %v163 = vld [vmem:[%s3 + $0x70] sm:$0xff]
    %v164 = vld [vmem:[%s3 + $0x78] sm:$0xff]
    %165 = vmatpush.msra.mxu0 %v164
    %166 = vmatpush.msra.mxu0 %v163
    %167 = vmatpush.msra.mxu0 %v162
    %168 = vmatpush.msra.mxu0 %v161
    %169 = vmatpush.msra.mxu0 %v160
    %170 = vmatpush.msra.mxu0 %v159
    %171 = vmatpush.msra.mxu0 %v158
    %172 = vmatpush.msra.mxu0 %v157
    %173 = vmatpush.msra.mxu0 %v156
    %174 = vmatpush.msra.mxu0 %v155
    %175 = vmatpush.msra.mxu0 %v154
    %176 = vmatpush.msra.mxu0 %v153
    %177 = vmatpush.msra.mxu0 %v152
    %178 = vmatpush.msra.mxu0 %v151
    %179 = vmatpush.msra.mxu0 %v150
    %180 = vmatpush.msra.mxu0 %v149
    %181 = vmatmul.f32.gmra.mxu0 %v91
    %v182 = vpop.f32.mrf.mxu0
    %v183 = vadd.f32 0.0, %v182
    %184 = vmatmul.f32.gmra.mxu0 %v94
    %v185 = vpop.f32.mrf.mxu0
    %v186 = vadd.f32 0.0, %v185
    %187 = vmatmul.f32.gmra.mxu0 %v97
    %v188 = vpop.f32.mrf.mxu0
    %v189 = vadd.f32 0.0, %v188
    %190 = vmatmul.f32.gmra.mxu0 %v100
    %v191 = vpop.f32.mrf.mxu0
    %v192 = vadd.f32 0.0, %v191
    %193 = vmatmul.f32.gmra.mxu0 %v103
    %v194 = vpop.f32.mrf.mxu0
    %v195 = vadd.f32 0.0, %v194
    %196 = vmatmul.f32.gmra.mxu0 %v106
    %v197 = vpop.f32.mrf.mxu0
    %v198 = vadd.f32 0.0, %v197
    %199 = vmatmul.f32.gmra.mxu0 %v109
    %v200 = vpop.f32.mrf.mxu0
    %v201 = vadd.f32 0.0, %v200
    %202 = vmatmul.f32.gmra.mxu0 %v112
    %v203 = vpop.f32.mrf.mxu0
    %v204 = vadd.f32 0.0, %v203
    %205 = vmatmul.f32.gmra.mxu0 %v115
    %v206 = vpop.f32.mrf.mxu0
    %v207 = vadd.f32 0.0, %v206
    %208 = vmatmul.f32.gmra.mxu0 %v118
    %v209 = vpop.f32.mrf.mxu0
    %v210 = vadd.f32 0.0, %v209
    %211 = vmatmul.f32.gmra.mxu0 %v121
    %v212 = vpop.f32.mrf.mxu0
    %v213 = vadd.f32 0.0, %v212
    %214 = vmatmul.f32.gmra.mxu0 %v124
    %v215 = vpop.f32.mrf.mxu0
    %v216 = vadd.f32 0.0, %v215
    %217 = vdwg.mxu0
    %vm218 = vcmask 7168
    %219 = vst.msk [vmem:[%s6] sm:$0xff] %vm218, %v183
    %220 = vst.msk [vmem:[%s6 + $0x8] sm:$0xff] %vm218, %v186
    %221 = vst.msk [vmem:[%s6 + $0x10] sm:$0xff] %vm218, %v189
    %222 = vst.msk [vmem:[%s6 + $0x18] sm:$0xff] %vm218, %v192
    %223 = vst.msk [vmem:[%s6 + $0x20] sm:$0xff] %vm218, %v195
    %224 = vst.msk [vmem:[%s6 + $0x28] sm:$0xff] %vm218, %v198
    %225 = vst.msk [vmem:[%s6 + $0x30] sm:$0xff] %vm218, %v201
    %226 = vst.msk [vmem:[%s6 + $0x38] sm:$0xff] %vm218, %v204
    %227 = vst.msk [vmem:[%s6 + $0x40] sm:$0xff] %vm218, %v207
    %228 = vst.msk [vmem:[%s6 + $0x48] sm:$0xff] %vm218, %v210
    %229 = vst.msk [vmem:[%s6 + $0x50] sm:$0xff] %vm218, %v213
    %230 = vst.msk [vmem:[%s6 + $0x58] sm:$0xff] %vm218, %v216
    %v231 = vpack.c.bf16 %v91, %v91
    %v232 = vpack.c.bf16 %v94, %v94
    %v233 = vpack.c.bf16 %v97, %v97
    %v234 = vpack.c.bf16 %v100, %v100
    %v235 = vpack.c.bf16 %v103, %v103
    %v236 = vpack.c.bf16 %v106, %v106
    %v237 = vpack.c.bf16 %v109, %v109
    %v238 = vpack.c.bf16 %v112, %v112
    %v239 = vpack.c.bf16 %v115, %v115
    %v240 = vpack.c.bf16 %v118, %v118
    %v241 = vpack.c.bf16 %v121, %v121
    %v242 = vpack.c.bf16 %v124, %v124
    %243 = vst [vmem:[#allocation2] sm:$0xf] %v231
    %244 = vst [vmem:[#allocation2 + $0x4] sm:$0xf] %v232
    %245 = vst [vmem:[#allocation2 + $0x8] sm:$0xf] %v233
    %246 = vst [vmem:[#allocation2 + $0xc] sm:$0xf] %v234
    %247 = vst [vmem:[#allocation2 + $0x10] sm:$0xf] %v235
    %248 = vst [vmem:[#allocation2 + $0x14] sm:$0xf] %v236
    %249 = vst [vmem:[#allocation2 + $0x18] sm:$0xf] %v237
    %250 = vst [vmem:[#allocation2 + $0x1c] sm:$0xf] %v238
    %251 = vst [vmem:[#allocation2 + $0x20] sm:$0xf] %v239
    %252 = vst [vmem:[#allocation2 + $0x24] sm:$0xf] %v240
    %253 = vst [vmem:[#allocation2 + $0x28] sm:$0xf] %v241
    %254 = vst [vmem:[#allocation2 + $0x2c] sm:$0xf] %v242
    // Predicated region
    $region18: #{tpu_custom_call.1} parent=1 // pred_check
      _
    $region19: #{tpu_custom_call.1} parent=1 // pred_check_branch
      %256 = sbr.rel (0) target = $region21
    $region20: #{tpu_custom_call.1} parent=1 // pred_region
      %258 = vsyncadd [#allocation3], 0
      %s259 = sshll.u32 [#allocation2], 4
      %s260 = int_to_ptr.vmem [resolvable:$true] %s259
      %s261 = sshll.u32 %s4, 4
      %s262 = int_to_ptr.hbm [resolvable:$true] %s261
      %267 = dma.vmem_to_hbm [thread:$0]  %s260, 768, %s262, [#allocation3], 64, 64, 4
    $region21: #{tpu_custom_call.1} parent=1 // pred_fallthru
      _
    // Predicated region
    $region22: #{tpu_custom_call.1} parent=1 // pred_check
      _
    $region23: #{tpu_custom_call.1} parent=1 // pred_check_branch
      %269 = sbr.rel (0) target = $region25
    $region24: #{tpu_custom_call.1} parent=1 // pred_region
      %271 = vsyncadd [#allocation5], 0
      %s273 = sshll.u32 [#allocation4], 4
      %s274 = int_to_ptr.vmem [resolvable:$true] %s273
      %s275 = sshll.u32 %s5, 4
      %s276 = int_to_ptr.hbm [resolvable:$true] %s275
      %278 = dma.vmem_to_hbm [thread:$0]  %s274, 16, %s276, [#allocation5]
    $region25: #{tpu_custom_call.1} parent=1 // pred_fallthru
      _
    // Predicated region
    $region26: #{tpu_custom_call.1} parent=1 // pred_check
      _
    $region27: #{tpu_custom_call.1} parent=1 // pred_check_branch
      %280 = sbr.rel (0) target = $region29
    $region28: #{tpu_custom_call.1} parent=1 // pred_region
      _
    $region29: #{tpu_custom_call.1} parent=1 // pred_fallthru
      _
    // Predicated region
    $region30: #{tpu_custom_call.1} parent=1 // pred_check
      _
    $region31: #{tpu_custom_call.1} parent=1 // pred_check_branch
      %282 = sbr.rel (0) target = $region33
    $region32: #{tpu_custom_call.1} parent=1 // pred_region
      %284 = dma.done [#allocation3], 768
    $region33: #{tpu_custom_call.1} parent=1 // pred_fallthru
      _
    // Predicated region
    $region34: #{tpu_custom_call.1} parent=1 // pred_check
      _
    $region35: #{tpu_custom_call.1} parent=1 // pred_check_branch
      %286 = sbr.rel (0) target = $region37
    $region36: #{tpu_custom_call.1} parent=1 // pred_region
      %288 = dma.done [#allocation5], 16
    $region37: #{tpu_custom_call.1} parent=1 // pred_fallthru
      _
    // Predicated region
    $region38: #{tpu_custom_call.1} parent=1 // pred_check
      _
    $region39: #{tpu_custom_call.1} parent=1 // pred_check_branch
      %290 = sbr.rel (0) target = $region41
    $region40: #{tpu_custom_call.1} parent=1 // pred_region
      _
    $region41: #{tpu_custom_call.1} parent=1 // pred_fallthru
      _
    %291 = vsyncpa [#allocation3], 1
    %292 = vsyncpa [#allocation5], 1

</llo_original>
